<compile_context>
chip_gen: v5e
topology: v5e:2x2
jax: 0.10.0
libtpu: 0.0.40
codegen_flags: <defaults>
</compile_context>

<pallas_src>
import functools

import jax
import jax.numpy as jnp
from jax import lax
from jax.experimental import pallas as pl
from jax.experimental.pallas import tpu as pltpu


def _round_up(x, m):
    return (x + m - 1) // m * m


def _vmem_capacity_bytes():
    """Physical VMEM per TensorCore; falls back to 128 MiB (v5e/v6e)."""
    try:
        info = pltpu.get_tpu_info()
        for attr in ("vmem_capacity_bytes", "vmem_bytes", "vmem_capacity",
                     "vmem_size_bytes"):
            v = getattr(info, attr, None)
            if v:
                return int(v)
    except Exception:
        pass
    return 128 << 20


def _chip_policy():
    cap = _vmem_capacity_bytes()
    if cap <= (64 << 20):
        # v7x-class: 64 MiB physical VMEM per TC -> conservative caps so both
        # pipeline buffers + compiler internal scratch always fit.
        return {"mono_threshold": 36 << 20,
                "vmem_limit_cap": 50 << 20,
                "tile_budget": 34 << 20}
    # v5e / v6e: 128 MiB physical VMEM (scoped defaults are only 16 / 32 MiB,
    # so an explicit vmem_limit_bytes is always passed).
    return {"mono_threshold": 84 << 20,
            "vmem_limit_cap": 104 << 20,
            "tile_budget": 72 << 20}


def _fast_recip(d):
    # EUP approximate reciprocal seed + one Newton-Raphson step (two cheap VPU
    # ops on a (C, 1) vector): avoids the exact-divide path, ~f32 accurate.
    r = pl.reciprocal(d, approx=True)
    return r * (2.0 - d * r)


def _softmax_rows(att):
    # softmax(rowmax(A) - A) == softmax(-A); stable form needs a single rowmin.
    e = jnp.exp(jnp.min(att, axis=-1, keepdims=True) - att)
    return e * _fast_recip(jnp.sum(e, axis=-1, keepdims=True))


# ----------------------------- monolithic path ------------------------------

def _cam_monolithic_kernel(beta_ref, x_ref, o_ref, *, use_bf16):
    # x_ref block: (C, Npad) (batch dim squeezed), bf16 if use_bf16 else f32.
    # beta_ref: (1,) f32 in SMEM.
    x = x_ref[...]

    # Gram = X @ X^T without materializing X^T: contract the shared last dim.
    att = lax.dot_general(
        x, x, dimension_numbers=(((1,), (1,)), ((), ())),
        preferred_element_type=jnp.float32)                       # (C, C)

    p = _softmax_rows(att)                                        # (C, C) f32
    if use_bf16:
        p = p.astype(jnp.bfloat16)

    feat_e = jnp.dot(p, x, preferred_element_type=jnp.float32)    # (C, Npad)
    o_ref[...] = (beta_ref[0] * feat_e
                  + x.astype(jnp.float32)).astype(o_ref.dtype)


def _cam_monolithic(xr, beta, out_dtype, est_bytes, policy, use_bf16):
    B, C, n_pad = xr.shape
    vmem_limit = int(min(policy["vmem_limit_cap"],
                         max(32 << 20, int(est_bytes * 1.25))))
    return pl.pallas_call(
        functools.partial(_cam_monolithic_kernel, use_bf16=use_bf16),
        out_shape=jax.ShapeDtypeStruct((B, C, n_pad), out_dtype),
        grid_spec=pltpu.PrefetchScalarGridSpec(
            num_scalar_prefetch=0,
            grid=(B,),
            in_specs=[
                pl.BlockSpec(memory_space=pltpu.MemorySpace.SMEM),           # beta
                pl.BlockSpec((pl.Squeezed(), C, n_pad), lambda b: (b, 0, 0)),
            ],
            out_specs=pl.BlockSpec((pl.Squeezed(), C, n_pad), lambda b: (b, 0, 0)),
        ),
        compiler_params=pltpu.CompilerParams(
            dimension_semantics=("parallel",),
            vmem_limit_bytes=vmem_limit),
    )(beta, xr)


# -------------------------- fused tiled path ---------------------------------

def _cam_fused_kernel(beta_ref, x_ref, o_ref, acc_ref, p_ref):
    # grid = (B, phase, n);  phase 0: Gram accumulation, phase 1: apply.
    ph = pl.program_id(1)
    n = pl.program_id(2)
    nt = pl.num_programs(2)
    is_gram = ph == 0

    @pl.when(jnp.logical_and(is_gram, n == 0))
    def _():
        acc_ref[...] = jnp.zeros_like(acc_ref)

    @pl.when(is_gram)
    def _():
        x = x_ref[...]                                            # (C, tn)
        acc_ref[...] += lax.dot_general(
            x, x, dimension_numbers=(((1,), (1,)), ((), ())),
            preferred_element_type=jnp.float32)

    @pl.when(jnp.logical_and(is_gram, n == nt - 1))
    def _():
        # Softmax once per batch; cast to the matmul dtype once here (not on
        # every apply tile).
        p_ref[...] = _softmax_rows(acc_ref[...]).astype(p_ref.dtype)

    @pl.when(ph == 1)
    def _():
        x = x_ref[...]
        feat_e = jnp.dot(p_ref[...], x, preferred_element_type=jnp.float32)
        o_ref[...] = (beta_ref[0] * feat_e
                      + x.astype(jnp.float32)).astype(o_ref.dtype)


def _tiled_per_step_bytes(C, tn, in_item, p_item):
    return (2 * C * tn * in_item          # X tile, double-buffered
            + 2 * C * tn * 4              # out tile, double-buffered
            + C * C * 4                   # Gram accumulator scratch
            + C * C * p_item              # softmax(P) scratch
            + 2 * C * C * 4)              # softmax temporaries (last Gram step)


def _pick_tile_n(N, C, in_item, p_item, budget, tile_n=None):
    if tile_n is not None:
        assert tile_n % 128 == 0
        return tile_n
    n128 = _round_up(N, 128)
    # Prefer wide tiles (>=512) where the data allows: 128-wide (C, tn) tiles
    # under-utilize HBM bandwidth badly.
    for cand in (4096, 2048, 1024, 512, 256, 128):
        if cand <= n128 and _tiled_per_step_bytes(C, cand, in_item, p_item) <= budget:
            return cand
    return 128


def _cam_tiled(xr, beta, out_dtype, policy, use_bf16, tn):
    B, C, n_pad = xr.shape
    assert n_pad % tn == 0
    nt = n_pad // tn
    p_dtype = jnp.bfloat16 if use_bf16 else jnp.float32
    per_step = _tiled_per_step_bytes(C, tn, xr.dtype.itemsize,
                                     2 if use_bf16 else 4)
    vmem_limit = int(min(policy["vmem_limit_cap"],
                         max(32 << 20, int(per_step * 1.3))))

    return pl.pallas_call(
        _cam_fused_kernel,
        out_shape=jax.ShapeDtypeStruct((B, C, n_pad), out_dtype),
        grid_spec=pltpu.PrefetchScalarGridSpec(
            num_scalar_prefetch=0,
            grid=(B, 2, nt),
            in_specs=[
                pl.BlockSpec(memory_space=pltpu.MemorySpace.SMEM),        # beta
                pl.BlockSpec((pl.Squeezed(), C, tn),
                             lambda b, ph, n: (b, 0, n)),                 # X tile
            ],
            # During the Gram phase (ph == 0) the kernel never writes o_ref; the
            # constant block index (b, 0, 0) keeps that block resident so the
            # first apply step overwrites it before any writeback happens (no
            # garbage flushes, no extra HBM write traffic).
            out_specs=pl.BlockSpec((pl.Squeezed(), C, tn),
                                   lambda b, ph, n: (b, 0, n * ph)),
            scratch_shapes=[pltpu.VMEM((C, C), jnp.float32),   # Gram accumulator
                            pltpu.VMEM((C, C), p_dtype)],      # softmax(P)
        ),
        compiler_params=pltpu.CompilerParams(
            dimension_semantics=("parallel", "arbitrary", "arbitrary"),
            vmem_limit_bytes=vmem_limit),
    )(beta, xr)


# -------------------------------- wrapper ------------------------------------

def cam_forward(x, beta, *, use_bf16_matmul="auto", force_tiled=False, tile_n=None):
    """x: (B, C, H, W) float32, beta: (1,) float32  ->  (B, C, H, W).

    use_bf16_matmul: "auto" enables bf16 operands (f32 accumulation) only in
    the large-C, MXU-bound regime; True forces it (tolerance dependent); False
    keeps everything f32.
    """
    B, C, H, W = x.shape
    N = H * W
    policy = _chip_policy()

    if use_bf16_matmul == "auto":
        use_bf16 = C >= 1024          # below this the kernel is HBM-bound; keep f32
    else:
        use_bf16 = bool(use_bf16_matmul)

    in_item = 2 if use_bf16 else 4
    p_item = 2 if use_bf16 else 4
    out_dtype = x.dtype

    # Monolithic per-step footprint estimate: double-buffered in/out slabs,
    # in-kernel f32 temporaries (feat_e + residual cast), (C, C) intermediates,
    # plus the bf16 P temporary when enabled.
    n128 = _round_up(N, 128)
    slab_in = C * n128 * in_item
    slab_f32 = C * n128 * 4
    cc = C * C
    est_mono = (2 * slab_in + 2 * slab_f32 + 2 * slab_f32
                + 4 * cc * 4 + (cc * 2 if use_bf16 else 0))

    xr = x.reshape(B, C, N)
    if use_bf16:
        xr = xr.astype(jnp.bfloat16)   # HBM-side cast: halves read traffic

    if force_tiled or est_mono > policy["mono_threshold"]:
        tn = _pick_tile_n(N, C, in_item, p_item, policy["tile_budget"], tile_n)
        n_pad = _round_up(N, tn)       # lane-dense, multiple of the tile width
        if n_pad != N:
            xr = jnp.pad(xr, ((0, 0), (0, 0), (0, n_pad - N)))
        out = _cam_tiled(xr, beta, out_dtype, policy, use_bf16, tn)
    else:
        n_pad = n128
        if n_pad != N:
            xr = jnp.pad(xr, ((0, 0), (0, 0), (0, n_pad - N)))
        out = _cam_monolithic(xr, beta, out_dtype, est_mono, policy, use_bf16)

    if n_pad != N:
        out = out[:, :, :N]
    return out.reshape(B, C, H, W)


def cam_reference(x, beta):
    """Pure-JAX reference mirroring the PyTorch _CAM forward."""
    B, C, H, W = x.shape
    feat_a = x.reshape(B, C, H * W)
    att = jnp.einsum("bcn,bdn->bcd", feat_a, feat_a)
    att_new = jnp.max(att, axis=-1, keepdims=True) - att
    att = jax.nn.softmax(att_new, axis=-1)
    feat_e = jnp.einsum("bcd,bdn->bcn", att, feat_a).reshape(B, C, H, W)
    return beta * feat_e + x


if __name__ == "__main__":
    key = jax.random.PRNGKey(0)
    k1, k2 = jax.random.split(key)

    # _CAM inside _TAHead operates on inter_channels = in_channels // 4 maps.
    B, C, H, W = 2, 4, 16, 16
    x = jax.random.normal(k1, (B, C, H, W), dtype=jnp.float32)

    # Parameter init per the module: beta = zeros(1)  -> out == x exactly.
    beta0 = jnp.zeros((1,), dtype=jnp.float32)
    out0 = cam_forward(x, beta0)
    jax.block_until_ready(out0)
    assert jnp.allclose(out0, cam_reference(x, beta0[0]), atol=1e-5, rtol=1e-5)

    # Non-trivial beta, monolithic (VMEM-resident, single X read) path.
    beta = jnp.full((1,), 0.5, dtype=jnp.float32)
    ref = cam_reference(x, beta[0])
    out = cam_forward(x, beta)
    jax.block_until_ready(out)
    assert jnp.allclose(out, ref, atol=1e-4, rtol=1e-4)

    # Fused tiled (phase-axis) path with multiple N tiles.
    out_t = cam_forward(x, beta, force_tiled=True, tile_n=128)
    jax.block_until_ready(out_t)
    assert jnp.allclose(out_t, ref, atol=1e-4, rtol=1e-4)

    # Non-multiple-of-128 spatial size exercises the lane-padding path.
    x2 = jax.random.normal(k2, (1, 8, 15, 15), dtype=jnp.float32)
    beta2 = jnp.full((1,), 0.7, dtype=jnp.float32)
    ref2 = cam_reference(x2, beta2[0])
    out2 = cam_forward(x2, beta2)
    jax.block_until_ready(out2)
    assert jnp.allclose(out2, ref2, atol=1e-4, rtol=1e-4)
    out2t = cam_forward(x2, beta2, force_tiled=True, tile_n=128)
    jax.block_until_ready(out2t)
    assert jnp.allclose(out2t, ref2, atol=1e-4, rtol=1e-4)

    print("KERNEL_OK")
</pallas_src>

<mosaic_0001>
module attributes {stable_mosaic.version = 11 : i64} {
  func.func @_cam_monolithic_kernel(%arg0: i32, %arg1: memref<1xf32, #tpu.memory_space<smem>>, %arg2: memref<1x4x256xf32, #tpu.memory_space<vmem>>, %arg3: memref<1x4x256xf32, #tpu.memory_space<vmem>>) attributes {dimension_semantics = [#tpu.dimension_semantics<parallel>], iteration_bounds = array<i64: 2>, scalar_prefetch = 0 : i64, scratch_operands = 0 : i64, tpu.core_type = #tpu.core_type<tc>, window_params = [{transform_indices = @transform_0, window_bounds = array<i64: 1>}, {transform_indices = @transform_1, window_bounds = array<i64: 1, 4, 256>}, {transform_indices = @transform_2, window_bounds = array<i64: 1, 4, 256>}]} {
    %c0 = arith.constant 0 : index
    %c0_0 = arith.constant 0 : index
    %c0_1 = arith.constant 0 : index
    %0 = vector.load %arg2[%c0, %c0_0, %c0_1] : memref<1x4x256xf32, #tpu.memory_space<vmem>>, vector<1x4x256xf32>
    %1 = vector.shape_cast %0 : vector<1x4x256xf32> to vector<4x256xf32>
    %cst = arith.constant dense<0.000000e+00> : vector<4x4xf32>
    %2 = tpu.matmul %1, %1, %cst {dimension_numbers = #tpu.dot_dimension_numbers<[1], [1], [0], [0], [0, 0, 1, 0], [], []>} : vector<4x256xf32>, vector<4x256xf32>, vector<4x4xf32> -> vector<4x4xf32>
    %cst_2 = arith.constant dense<0x7F800000> : vector<4xf32>
    %3 = vector.multi_reduction <minimumf>, %2, %cst_2 [1] : vector<4x4xf32> to vector<4xf32>
    %4 = vector.shape_cast %3 : vector<4xf32> to vector<4x1xf32>
    %5 = vector.broadcast %4 : vector<4x1xf32> to vector<4x4xf32>
    %6 = arith.subf %5, %2 : vector<4x4xf32>
    %7 = math.exp %6 : vector<4x4xf32>
    %cst_3 = arith.constant dense<0.000000e+00> : vector<4xf32>
    %8 = vector.multi_reduction <add>, %7, %cst_3 [1] : vector<4x4xf32> to vector<4xf32>
    %9 = vector.shape_cast %8 : vector<4xf32> to vector<4x1xf32>
    %10 = tpu.reciprocal %9 {approx = true} : vector<4x1xf32> -> vector<4x1xf32>
    %11 = arith.mulf %9, %10 : vector<4x1xf32>
    %cst_4 = arith.constant 2.000000e+00 : f32
    %12 = vector.broadcast %cst_4 : f32 to vector<4x1xf32>
    %13 = arith.subf %12, %11 : vector<4x1xf32>
    %14 = arith.mulf %10, %13 : vector<4x1xf32>
    %15 = vector.broadcast %14 : vector<4x1xf32> to vector<4x4xf32>
    %16 = arith.mulf %7, %15 : vector<4x4xf32>
    %cst_5 = arith.constant dense<0.000000e+00> : vector<4x256xf32>
    %17 = tpu.matmul %16, %1, %cst_5 {dimension_numbers = #tpu.dot_dimension_numbers<[1], [0], [0], [1], [0, 0, 1, 1], [], []>} : vector<4x4xf32>, vector<4x256xf32>, vector<4x256xf32> -> vector<4x256xf32>
    %c0_6 = arith.constant 0 : index
    %18 = memref.load %arg1[%c0_6] : memref<1xf32, #tpu.memory_space<smem>>
    %19 = vector.broadcast %18 : f32 to vector<4x256xf32>
    %20 = arith.mulf %19, %17 : vector<4x256xf32>
    %21 = arith.addf %20, %1 : vector<4x256xf32>
    %c0_7 = arith.constant 0 : index
    %c0_8 = arith.constant 0 : index
    %c0_9 = arith.constant 0 : index
    %22 = vector.load %arg3[%c0_7, %c0_8, %c0_9] : memref<1x4x256xf32, #tpu.memory_space<vmem>>, vector<1x4x256xf32>
    %23 = vector.shape_cast %22 : vector<1x4x256xf32> to vector<4x256xf32>
    %24 = vector.shape_cast %21 : vector<4x256xf32> to vector<1x4x256xf32>
    tpu.vector_store %arg3[%c0_7, %c0_8, %c0_9], %24 {strides = array<i32>} : memref<1x4x256xf32, #tpu.memory_space<vmem>>, vector<1x4x256xf32>,
    return
  }
  func.func @transform_0(%arg0: i32) -> i32 {
    %c0_i32 = arith.constant 0 : i32
    %c0_i32_0 = arith.constant 0 : i32
    return %c0_i32 : i32
  }
  func.func @transform_1(%arg0: i32) -> (i32, i32, i32) {
    %c0_i32 = arith.constant 0 : i32
    %c0_i32_0 = arith.constant 0 : i32
    %c0_i32_1 = arith.constant 0 : i32
    return %arg0, %c0_i32, %c0_i32_0 : i32, i32, i32
  }
  func.func @transform_2(%arg0: i32) -> (i32, i32, i32) {
    %c0_i32 = arith.constant 0 : i32
    %c0_i32_0 = arith.constant 0 : i32
    %c0_i32_1 = arith.constant 0 : i32
    return %arg0, %c0_i32, %c0_i32_0 : i32, i32, i32
  }
}

</mosaic_0001>

<llo_original>
// kernel: tpu_custom_call.1
$region0: #{tpu_custom_call.1}
  #allocation0 [shape = 'u32[]', space=smem, size = 0x4, offset = 0x4, fixed_abs, tag = 'smem constant byte address 0x4 - core index']
  #allocation1 [shape = 'u32[72,128]{1,0:T(1,128)}', space=vmem, size = 0x9000, scoped, tag = 'internal scratch']
  #allocation2 [shape = 'f32[1]{0:T(128)S(6)}', space=smem, size = 0x200, scoped, tag = 'scoped memory for tpu_custom_call.1']
  %s0 = inlined_call_operand.<no memory space> [shape: f32[1], index: 0, kind: input, shape index: {}]
  %s1 = inlined_call_operand.hbm [shape: f32[2,4,256], index: 1, kind: input, shape index: {}]
  %s2 = inlined_call_operand.hbm [shape: f32[2,4,256], index: 2, kind: output, shape index: {}]
  %s3 = sld [smem:[#allocation0]]
  $region45: #{tpu_custom_call.1} parent=0
    _
  %s5 = ssub.s32 1, %s3
  %s6 = scalar_select 0, %s5, %s3
  %7 = sst [smem:[#allocation2]] %s0
  $region1: #{tpu_custom_call.1} parent=0
    #allocation3 [shape = 'u8[8192]{0}', space=vmem, size = 0x2000, scoped, tag = 'input window, operand 1']
    #allocation4 [shape = 's32[2]{0}', space=sflag, size = 0x8, scoped, tag = 'scoped memory for tpu_custom_call.1']
    #allocation5 [shape = 's32[2]{0}', space=sflag, size = 0x8, scoped, tag = 'scoped memory for tpu_custom_call.1']
    #allocation6 [shape = 'u8[8192]{0}', space=vmem, size = 0x2000, scoped, tag = 'output window, operand 0']
    %8 = vsyncpa [#allocation4], 0
    %s9 = scalar_lea.sflag [#allocation4], 1
    %10 = vsyncpa %s9, 0
    %11 = vsyncpa [#allocation5], 0
    %s12 = scalar_lea.sflag [#allocation5], 1
    %13 = vsyncpa %s12, 0
    loop: start=0, step=1, limit=4
    $region2: #{tpu_custom_call.1} parent=1 // loop_pre_header
      _
    $region3: #{tpu_custom_call.1} parent=1 // loop_header
      %s15 = sphi 0, %s19
      %p16 = scmp.ge.s32.totalorder %s15, 4
      %s23 = sphi 0, %s23
      %s25 = sphi 0, %s23
      %s26 = sphi 0, %s25
      %s40 = sphi 0, %s26
      %s46 = sphi 0, %s48
      %s49 = sphi 0, %s46
      %s50 = sphi 0, %s49
      %s66 = sphi 0, %s50
      %s72 = sphi 0, %s74
      %s75 = sphi 0, %s72
      %s76 = sphi 0, %s75
      %s92 = sphi 0, %s76
    $region4: #{tpu_custom_call.1} parent=1 // loop_header_branch
      %18 = sbr.rel (%p16) target = $region8
    $region5: #{tpu_custom_call.1} parent=1 // loop_body
      %s20 = ssub.s32 %s15, 1
      %s21 = ssub.s32 %s15, 2
      %s22 = sadd.s32 %s15, 1
      %s24 = sadd.s32 %s23, 1
      %p27 = scmp.eq.s32.totalorder %s15, 1
      %p28 = scmp.ne.s32.totalorder %s23, %s25
      %p29 = scmp.eq.s32.totalorder %s15, 0
      %p30 = por %p28, %p29
      %p31 = scmp.ne.s32.totalorder %s23, %s25
      %p32 = scmp.eq.s32.totalorder %s20, 1
      %p33 = por %p31, %p32
      %p34 = scmp.ne.s32.totalorder %s25, %s26
      %p35 = scmp.eq.s32.totalorder %s20, 0
      %p36 = por %p34, %p35
      %p37 = scmp.ne.s32.totalorder %s25, %s26
      %p38 = scmp.eq.s32.totalorder %s21, 1
      %p39 = por %p37, %p38
      %p41 = scmp.ne.s32.totalorder %s26, %s40
      %p42 = scmp.eq.s32.totalorder %s21, 0
      %p43 = por %p41, %p42
      %s44 = ssub.s32 %s15, %s22
      %p45 = scmp.eq.s32.totalorder %s44, 0
      %s47 = sadd.s32 %s46, 1
      %s48 = scalar_select %p45, %s46, %s47
      %p51 = pneg %p45
      %p52 = scmp.eq.s32.totalorder %s15, 1
      %p53 = por %p51, %p52
      %p54 = scmp.ne.s32.totalorder %s46, %s49
      %p55 = scmp.eq.s32.totalorder %s15, 0
      %p56 = por %p54, %p55
      %p57 = scmp.ne.s32.totalorder %s46, %s49
      %p58 = scmp.eq.s32.totalorder %s20, 1
      %p59 = por %p57, %p58
      %p60 = scmp.ne.s32.totalorder %s49, %s50
      %p61 = scmp.eq.s32.totalorder %s20, 0
      %p62 = por %p60, %p61
      %p63 = scmp.ne.s32.totalorder %s49, %s50
      %p64 = scmp.eq.s32.totalorder %s21, 1
      %p65 = por %p63, %p64
      %p67 = scmp.ne.s32.totalorder %s50, %s66
      %p68 = scmp.eq.s32.totalorder %s21, 0
      %p69 = por %p67, %p68
      %s70 = ssub.s32 %s15, %s22
      %p71 = scmp.eq.s32.totalorder %s70, 0
      %s73 = sadd.s32 %s72, 1
      %s74 = scalar_select %p71, %s72, %s73
      %p77 = pneg %p71
      %p78 = scmp.eq.s32.totalorder %s15, 1
      %p79 = por %p77, %p78
      %p80 = scmp.ne.s32.totalorder %s72, %s75
      %p81 = scmp.eq.s32.totalorder %s15, 0
      %p82 = por %p80, %p81
      %p83 = scmp.ne.s32.totalorder %s72, %s75
      %p84 = scmp.eq.s32.totalorder %s20, 1
      %p85 = por %p83, %p84
      %p86 = scmp.ne.s32.totalorder %s75, %s76
      %p87 = scmp.eq.s32.totalorder %s20, 0
      %p88 = por %p86, %p87
      %p89 = scmp.ne.s32.totalorder %s75, %s76
      %p90 = scmp.eq.s32.totalorder %s21, 1
      %p91 = por %p89, %p90
      %p93 = scmp.ne.s32.totalorder %s76, %s92
      %p94 = scmp.eq.s32.totalorder %s21, 0
      %p95 = por %p93, %p94
      %p96 = scmp.le.s32.totalorder 1, %s15
      %p97 = scmp.lt.s32.totalorder %s15, 3
      %p98 = pnand %p96, %p97
      %p99 = pneg %p98
      // Predicated region
      $region9: #{tpu_custom_call.1} parent=5 // pred_check
        _
      $region10: #{tpu_custom_call.1} parent=5 // pred_check_branch
        %101 = sbr.rel (%p98) target = $region12
      $region11: #{tpu_custom_call.1} parent=5 // pred_region
        %s102 = ssub.s32 %s15, 1
        // Predicated region
        $region13: #{tpu_custom_call.1} parent=11 // pred_check
          %p103 = pneg %p36
        $region14: #{tpu_custom_call.1} parent=11 // pred_check_branch
          %105 = sbr.rel (%p103) target = $region16
        $region15: #{tpu_custom_call.1} parent=11 // pred_region
          _
        $region16: #{tpu_custom_call.1} parent=11 // pred_fallthru
          _
      $region12: #{tpu_custom_call.1} parent=5 // pred_fallthru
        _
      %p106 = scmp.lt.s32.totalorder %s15, 2
      // Predicated region
      $region17: #{tpu_custom_call.1} parent=5 // pred_check
        %p107 = pneg %p106
      $region18: #{tpu_custom_call.1} parent=5 // pred_check_branch
        %109 = sbr.rel (%p107) target = $region20
      $region19: #{tpu_custom_call.1} parent=5 // pred_region
        // Predicated region
        $region21: #{tpu_custom_call.1} parent=19 // pred_check
          %p110 = pneg %p56
        $region22: #{tpu_custom_call.1} parent=19 // pred_check_branch
          %112 = sbr.rel (%p110) target = $region24
        $region23: #{tpu_custom_call.1} parent=19 // pred_region
          %s113 = sand.u32 %s46, 1
          %s114 = scalar_lea.sflag [#allocation4], %s113
          %s115 = sand.u32 %s46, 1
          %s116 = smul.addr %s115, 8
          %s117 = scalar_lea.vmem [#allocation3], %s116
          %119 = vsyncadd %s114, 0
          %s120 = smul.addr %s15, 2
          %s121 = smul.addr %s120, 4
          %s122 = scalar_lea.hbm %s1, %s121
          %s124 = sshll.u32 %s122, 4
          %s125 = int_to_ptr.hbm [resolvable:$true] %s124
          %s126 = sshll.u32 %s117, 4
          %s127 = int_to_ptr.vmem [resolvable:$true] %s126
          %129 = dma.hbm_to_vmem [thread:$0]  %s125, 128, %s127, %s114
        $region24: #{tpu_custom_call.1} parent=19 // pred_fallthru
          _
      $region20: #{tpu_custom_call.1} parent=5 // pred_fallthru
        _
      %p130 = scmp.le.s32.totalorder 1, %s15
      %p131 = scmp.lt.s32.totalorder %s15, 3
      %p132 = pnand %p130, %p131
      %p133 = pneg %p132
      // Predicated region
      $region25: #{tpu_custom_call.1} parent=5 // pred_check
        _
      $region26: #{tpu_custom_call.1} parent=5 // pred_check_branch
        %135 = sbr.rel (%p132) target = $region28
      $region27: #{tpu_custom_call.1} parent=5 // pred_region
        %s136 = ssub.s32 %s15, 1
        %s137 = sand.u32 %s49, 1
        %s138 = scalar_lea.sflag [#allocation4], %s137
        %s139 = sand.u32 %s49, 1
        %s140 = smul.addr %s139, 8
        %s141 = scalar_lea.vmem [#allocation3], %s140
        // Predicated region
        $region29: #{tpu_custom_call.1} parent=27 // pred_check
          %p142 = pneg %p62
        $region30: #{tpu_custom_call.1} parent=27 // pred_check_branch
          %144 = sbr.rel (%p142) target = $region32
        $region31: #{tpu_custom_call.1} parent=27 // pred_region
          %146 = dma.done %s138, 128
        $region32: #{tpu_custom_call.1} parent=27 // pred_fallthru
          _
        %p147 = pneg %p36
        %p148 = pneg %p33
        %s149 = sand.u32 %s49, 1
        %s150 = scalar_lea.sflag [#allocation4], %s149
        %s151 = sand.u32 %s49, 1
        %s152 = smul.addr %s151, 8
        %s153 = scalar_lea.vmem [#allocation3], %s152
        %p154 = pneg %p62
        %p155 = pneg %p59
        %p156 = pneg %p88
        %p157 = pneg %p85
        %s158 = sand.u32 %s75, 1
        %s159 = scalar_lea.sflag [#allocation5], %s158
        %s160 = sand.u32 %s75, 1
        %s161 = smul.addr %s160, 8
        %s162 = scalar_lea.vmem [#allocation6], %s161
        %v163 = vld [vmem:[%s141] sm:$0xff]
        %165 = vst [vmem:[#allocation1] ss:$2 sm:$0xff] %v163
        %v166 = vld.sshfl [vmem:[#allocation1] sm:$0xff pattern:$0x75316420]
        %v167 = vld.sshfl [vmem:[#allocation1 + $0x8] sm:$0xff pattern:$0x75316420]
        %170 = vst [vmem:[#allocation1] ss:$2 sm:$0xff] %v163
        %v171 = vld.sshfl [vmem:[#allocation1] sm:$0xff pattern:$0x75316420]
        %v172 = vld.sshfl [vmem:[#allocation1 + $0x8] sm:$0xff pattern:$0x75316420]
        %175 = vmatpush.xpose.msra.mxu0 0.0
        %176 = vmatpush.xpose.msra.mxu0 0.0
        %177 = vmatpush.xpose.msra.mxu0 0.0
        %178 = vmatpush.xpose.msra.mxu0 0.0
        %179 = vmatpush.xpose.msra.mxu0 0.0
        %180 = vmatpush.xpose.msra.mxu0 0.0
        %181 = vmatpush.xpose.msra.mxu0 0.0
        %182 = vmatpush.xpose.msra.mxu0 0.0
        %183 = vmatpush.xpose.msra.mxu0 0.0
        %184 = vmatpush.xpose.msra.mxu0 0.0
        %185 = vmatpush.xpose.msra.mxu0 0.0
        %186 = vmatpush.xpose.msra.mxu0 0.0
        %187 = vmatpush.xpose.msra.mxu0 0.0
        %188 = vmatpush.xpose.msra.mxu0 0.0
        %189 = vmatpush.xpose.msra.mxu0 0.0
        %190 = vmatpush.xpose.msra.mxu0 %v171
        %191 = vmatmul.f32.gmra.mxu0 %v166
        %v192 = vpop.f32.mrf.mxu0
        %v193 = vadd.f32 0.0, %v192
        %194 = vdwg.mxu0
        %195 = vmatpush.xpose.msra.mxu0 0.0
        %196 = vmatpush.xpose.msra.mxu0 0.0
        %197 = vmatpush.xpose.msra.mxu0 0.0
        %198 = vmatpush.xpose.msra.mxu0 0.0
        %199 = vmatpush.xpose.msra.mxu0 0.0
        %200 = vmatpush.xpose.msra.mxu0 0.0
        %201 = vmatpush.xpose.msra.mxu0 0.0
        %202 = vmatpush.xpose.msra.mxu0 0.0
        %203 = vmatpush.xpose.msra.mxu0 0.0
        %204 = vmatpush.xpose.msra.mxu0 0.0
        %205 = vmatpush.xpose.msra.mxu0 0.0
        %206 = vmatpush.xpose.msra.mxu0 0.0
        %207 = vmatpush.xpose.msra.mxu0 0.0
        %208 = vmatpush.xpose.msra.mxu0 0.0
        %209 = vmatpush.xpose.msra.mxu0 0.0
        %210 = vmatpush.xpose.msra.mxu0 %v172
        %211 = vmatmul.f32.gmra.mxu0 %v167
        %v212 = vpop.f32.mrf.mxu0
        %v213 = vadd.f32 %v193, %v212
        %214 = vdwg.mxu0
        %vm215 = vcmask 27648
        %v216 = vsel %vm215, %v213, inf
        %217 = vmin.xlane.f32.xlu0 %v216
        %v218 = vpop.xlane.xlu0 %217
        %v219 = vsub.f32 %v218, %v213
        %v220 = vmul.f32 %v219, 1.442695
        %v221 = vpow.pop %v220
        %v222 = vsel %vm215, %v221, 0.0
        %223 = vadd.xlane.f32.xlu0 %v222
        %v224 = vpop.xlane.xlu0 %223
        %v225 = vrcp.pop %v224
        %v226 = vmul.f32 %v224, %v225
        %v227 = vsub.f32 2.0, %v226
        %v228 = vmul.f32 %v225, %v227
        %v229 = vmul.f32 %v221, %v228
        %230 = vst [vmem:[#allocation1] ss:$2 sm:$0xff] %v163
        %v231 = vld.sshfl [vmem:[#allocation1] sm:$0xff pattern:$0x75316420]
        %v232 = vld.sshfl [vmem:[#allocation1 + $0x8] sm:$0xff pattern:$0x75316420]
        %vm233 = vcmask 31744
        %v235 = vsel %vm233, %v229, 0
        %vm237 = vcmask 1043456
        %v238 = vsel %vm237, %v231, 0
        %v240 = vsel %vm237, %v232, 0
        %242 = vmatpush.msra.mxu0 0.0
        %243 = vmatpush.msra.mxu0 0.0
        %244 = vmatpush.msra.mxu0 0.0
        %245 = vmatpush.msra.mxu0 0.0
        %246 = vmatpush.msra.mxu0 0.0
        %247 = vmatpush.msra.mxu0 0.0
        %248 = vmatpush.msra.mxu0 0.0
        %249 = vmatpush.msra.mxu0 0.0
        %250 = vmatpush.msra.mxu0 0.0
        %251 = vmatpush.msra.mxu0 0.0
        %252 = vmatpush.msra.mxu0 0.0
        %253 = vmatpush.msra.mxu0 0.0
        %254 = vmatpush.msra.mxu0 0.0
        %255 = vmatpush.msra.mxu0 0.0
        %256 = vmatpush.msra.mxu0 0.0
        %257 = vmatpush.msra.mxu0 %v238
        %258 = vmatmul.f32.gmra.mxu0 %v235
        %v259 = vpop.f32.mrf.mxu0
        %v260 = vadd.f32 0.0, %v259
        %261 = vdwg.mxu0
        %262 = vmatpush.msra.mxu0 0.0
        %263 = vmatpush.msra.mxu0 0.0
        %264 = vmatpush.msra.mxu0 0.0
        %265 = vmatpush.msra.mxu0 0.0
        %266 = vmatpush.msra.mxu0 0.0
        %267 = vmatpush.msra.mxu0 0.0
        %268 = vmatpush.msra.mxu0 0.0
        %269 = vmatpush.msra.mxu0 0.0
        %270 = vmatpush.msra.mxu0 0.0
        %271 = vmatpush.msra.mxu0 0.0
        %272 = vmatpush.msra.mxu0 0.0
        %273 = vmatpush.msra.mxu0 0.0
        %274 = vmatpush.msra.mxu0 0.0
        %275 = vmatpush.msra.mxu0 0.0
        %276 = vmatpush.msra.mxu0 0.0
        %277 = vmatpush.msra.mxu0 %v240
        %278 = vmatmul.f32.gmra.mxu0 %v235
        %v279 = vpop.f32.mrf.mxu0
        %v280 = vadd.f32 0.0, %v279
        %281 = vdwg.mxu0
        %s282 = sld [smem:[#allocation2]]
        %v283 = vstv %s282
        %v284 = vmul.f32 %v283, %v260
        %v285 = vmul.f32 %v283, %v280
        %286 = vst [vmem:[#allocation1] ss:$2 sm:$0xff] %v163
        %v287 = vld.sshfl [vmem:[#allocation1] sm:$0xff pattern:$0x75316420]
        %v288 = vld.sshfl [vmem:[#allocation1 + $0x8] sm:$0xff pattern:$0x75316420]
        %v291 = vadd.f32 %v284, %v287
        %v292 = vadd.f32 %v285, %v288
        %v295 = vrot.slane %v292, 4
        %v296 = vsel %vm237, %v291, %v295
        %298 = vst [vmem:[%s162] sm:$0xff] %v296
        %s299 = sand.u32 %s75, 1
        %s300 = scalar_lea.sflag [#allocation5], %s299
        %s301 = sand.u32 %s75, 1
        %s302 = smul.addr %s301, 8
        %s303 = scalar_lea.vmem [#allocation6], %s302
        // Predicated region
        $region33: #{tpu_custom_call.1} parent=27 // pred_check
          %p304 = pneg %p85
        $region34: #{tpu_custom_call.1} parent=27 // pred_check_branch
          %306 = sbr.rel (%p304) target = $region36
        $region35: #{tpu_custom_call.1} parent=27 // pred_region
          %308 = vsyncadd %s300, 0
          %s309 = smul.addr %s20, 2
          %s310 = smul.addr %s309, 4
          %s311 = scalar_lea.hbm %s2, %s310
          %s313 = sshll.u32 %s303, 4
          %s314 = int_to_ptr.vmem [resolvable:$true] %s313
          %s315 = sshll.u32 %s311, 4
          %s316 = int_to_ptr.hbm [resolvable:$true] %s315
          %318 = dma.vmem_to_hbm [thread:$0]  %s314, 128, %s316, %s300
        $region36: #{tpu_custom_call.1} parent=27 // pred_fallthru
          _
      $region28: #{tpu_custom_call.1} parent=5 // pred_fallthru
        _
      %p319 = scmp.le.s32.totalorder 2, %s15
      // Predicated region
      $region37: #{tpu_custom_call.1} parent=5 // pred_check
        %p320 = pneg %p319
      $region38: #{tpu_custom_call.1} parent=5 // pred_check_branch
        %322 = sbr.rel (%p320) target = $region40
      $region39: #{tpu_custom_call.1} parent=5 // pred_region
        %s323 = ssub.s32 %s15, 2
        // Predicated region
        $region41: #{tpu_custom_call.1} parent=39 // pred_check
          %p324 = pneg %p91
        $region42: #{tpu_custom_call.1} parent=39 // pred_check_branch
          %326 = sbr.rel (%p324) target = $region44
        $region43: #{tpu_custom_call.1} parent=39 // pred_region
          %s327 = sand.u32 %s76, 1
          %s328 = scalar_lea.sflag [#allocation5], %s327
          %s329 = sand.u32 %s76, 1
          %s330 = smul.addr %s329, 8
          %s331 = scalar_lea.vmem [#allocation6], %s330
          %333 = dma.done %s328, 128
        $region44: #{tpu_custom_call.1} parent=39 // pred_fallthru
          _
      $region40: #{tpu_custom_call.1} parent=5 // pred_fallthru
        _
    $region6: #{tpu_custom_call.1} parent=1 // loop_footer
      %s19 = sadd.s32 1, %s15
    $region7: #{tpu_custom_call.1} parent=1 // loop_footer_branch
      %14 = sbr.rel target = $region3
    $region8: #{tpu_custom_call.1} parent=1 // loop_exit
      _
    %334 = vsyncpa [#allocation4], 1
    %s335 = scalar_lea.sflag [#allocation4], 1
    %336 = vsyncpa %s335, 1
    %337 = vsyncpa [#allocation5], 1
    %s338 = scalar_lea.sflag [#allocation5], 1
    %339 = vsyncpa %s338, 1

</llo_original>
